<compile_context>
chip_gen: v7x
topology: tpu7x:2x2x1
jax: 0.10.0
libtpu: 0.0.40
codegen_flags: <defaults>
</compile_context>

<pallas_src>
import jax
import jax.numpy as jnp
from jax.experimental import pallas as pl
from jax.experimental.pallas import tpu as pltpu
import numpy as np

FC_UNITS = [400, 300]


def _round_up(x, m):
    return ((x + m - 1) // m) * m


def _pick_tm(B):
    """Batch-tile size heuristic.

    - tiny B: one tile (rounded to 8 sublanes)
    - 64 < B <= 256: split into 2 tiles so v7x's two TensorCores both work
    - otherwise TM=128 (fills v5e's 128-wide MXU, minimal padding waste),
      bumped to 256/512 for large B to amortize per-grid-step overhead on
      v6e/v7x.
    """
    b8 = _round_up(max(B, 1), 8)
    if b8 <= 64:
        return b8
    if b8 <= 256:
        return _round_up((b8 + 1) // 2, 8)
    if B >= 2048:
        return 512
    if B >= 1024:
        return 256
    return 128


def critic_kernel(state_ref, actions_ref,
                  w1_ref, b1_ref,
                  w2x_ref, w2a_ref, b2_ref,
                  w3_ref, b3_ref,
                  out_ref):
    # Cast activations to the matmul-operand dtype inside the kernel (free VPU
    # slot work; avoids a separate un-fused XLA cast + HBM round trip).
    x = state_ref[...].astype(w1_ref.dtype)      # (TM, S)
    a = actions_ref[...].astype(w2a_ref.dtype)   # (TM, A)

    # fc1 + ReLU: MXU matmul (bf16 operands by default), f32 accumulate,
    # f32 bias/ReLU.
    h1 = jnp.dot(x, w1_ref[...], preferred_element_type=jnp.float32) + b1_ref[...]
    h1 = jnp.maximum(h1, 0.0)

    # fc2 on concat(h1, actions) + ReLU, as a split-weight matmul:
    #   cat(h1, a) @ W2 == h1 @ W2[:400] + a @ W2[400:]
    h2 = (jnp.dot(h1.astype(w2x_ref.dtype), w2x_ref[...],
                  preferred_element_type=jnp.float32)
          + jnp.dot(a, w2a_ref[...], preferred_element_type=jnp.float32)
          + b2_ref[...])
    h2 = jnp.maximum(h2, 0.0)                    # (TM, F2p) f32

    # fc3 (N=1 Q head), computed directly as a lane-dense (1, TM) row:
    #   q_row = w3 (1, F2) @ h2^T (F2, TM)
    # Same rhs-transposed pattern as q @ k.T in flash attention; tiny matmul,
    # kept in f32 for accuracy.
    q_row = jnp.dot(w3_ref[...], h2.T, preferred_element_type=jnp.float32)

    # b3 is a scalar in SMEM.
    out_ref[...] = (q_row + b3_ref[0]).astype(out_ref.dtype)


def critic_forward(state, actions, padded_params, *, tm=None):
    """state: (B, state_size) f32, actions: (B, action_size) f32 -> (B, 1) f32."""
    B, S = state.shape
    A = actions.shape[1]
    w1, b1, w2x, w2a, b2, w3, b3 = padded_params
    f1p = w1.shape[1]    # 512
    f2p = w2x.shape[1]   # 384

    if tm is None:
        tm = _pick_tm(B)
    b_pad = _round_up(B, tm)
    if b_pad != B:
        state = jnp.pad(state, ((0, b_pad - B), (0, 0)))
        actions = jnp.pad(actions, ((0, b_pad - B), (0, 0)))
    num_tiles = b_pad // tm

    out = pl.pallas_call(
        critic_kernel,
        # Lane-dense transposed output: one (1, TM) f32 row per grid step.
        out_shape=jax.ShapeDtypeStruct((num_tiles, 1, tm), jnp.float32),
        grid_spec=pltpu.PrefetchScalarGridSpec(
            num_scalar_prefetch=0,
            grid=(num_tiles,),
            in_specs=[
                # Activations: streamed per batch tile.
                pl.BlockSpec((tm, S), lambda i: (i, 0)),
                pl.BlockSpec((tm, A), lambda i: (i, 0)),
                # Weights/biases: constant index_map -> DMA'd once, kept
                # resident in VMEM across all grid steps.
                pl.BlockSpec((S, f1p), lambda i: (0, 0)),
                pl.BlockSpec((1, f1p), lambda i: (0, 0)),
                pl.BlockSpec((f1p, f2p), lambda i: (0, 0)),
                pl.BlockSpec((A, f2p), lambda i: (0, 0)),
                pl.BlockSpec((1, f2p), lambda i: (0, 0)),
                pl.BlockSpec((1, f2p), lambda i: (0, 0)),
                # b3: single scalar, lives in SMEM.
                pl.BlockSpec(memory_space=pltpu.MemorySpace.SMEM),
            ],
            out_specs=pl.BlockSpec((None, 1, tm), lambda i: (i, 0, 0)),
        ),
        compiler_params=pltpu.CompilerParams(
            dimension_semantics=("parallel",)),  # shards batch tiles over v7x's 2 TCs
    )(state, actions, w1, b1, w2x, w2a, b2, w3, b3)

    # (num_tiles, 1, tm) -> (b_pad, 1) -> drop padded rows.
    return out.reshape(b_pad, 1)[:B]


def init_params(key, state_size, action_size):
    """Deterministic init mirroring Critic.reset_parameters().

    Note: hidden_init() in the reference uses weight.size()[0], which for
    nn.Linear is out_features; we reproduce that quirk (lim = 1/sqrt(out_f)).
    Biases keep a default small uniform init. Weights are stored as
    (in_features, out_features) so forward is `x @ W + b`.
    """
    k1, k2, k3, kb1, kb2, kb3 = jax.random.split(key, 6)
    f1, f2 = FC_UNITS

    lim1 = 1.0 / np.sqrt(f1)
    lim2 = 1.0 / np.sqrt(f2)
    lim3 = 0.003

    w1 = jax.random.uniform(k1, (state_size, f1), jnp.float32, -lim1, lim1)
    w2 = jax.random.uniform(k2, (f1 + action_size, f2), jnp.float32, -lim2, lim2)
    w3 = jax.random.uniform(k3, (f2, 1), jnp.float32, -lim3, lim3)

    b1 = jax.random.uniform(kb1, (1, f1), jnp.float32,
                            -1.0 / np.sqrt(state_size), 1.0 / np.sqrt(state_size))
    b2 = jax.random.uniform(kb2, (1, f2), jnp.float32,
                            -1.0 / np.sqrt(f1 + action_size),
                            1.0 / np.sqrt(f1 + action_size))
    b3 = jax.random.uniform(kb3, (1, 1), jnp.float32,
                            -1.0 / np.sqrt(f2), 1.0 / np.sqrt(f2))

    # Split W2 into the h1 part and the actions part (equivalent to concat).
    w2x = w2[:f1, :]
    w2a = w2[f1:, :]
    return (w1, b1, w2x, w2a, b2, w3, b3)


def pad_params(params, *, compute_dtype=jnp.bfloat16):
    """Zero-pad hidden dims to lane multiples (400->512, 300->384) and cast
    the large MXU operands (w1, w2x, w2a) to `compute_dtype` ONCE here.

    Padding is zeros only, so the math matches the unpadded forward exactly:
    relu(0)=0 and zero w3 entries contribute nothing.  Biases, the w3 row and
    b3 stay f32 (accumulation / bias / ReLU / head are f32 in the kernel).
    w3 is stored as a (1, f2p) row; b3 as a (1,) scalar for SMEM.
    """
    w1, b1, w2x, w2a, b2, w3, b3 = params
    S = w1.shape[0]
    A = w2a.shape[0]
    f1 = w1.shape[1]
    f2 = w2x.shape[1]
    f1p = _round_up(f1, 128)
    f2p = _round_up(f2, 128)

    w1p = jnp.zeros((S, f1p), jnp.float32).at[:, :f1].set(w1).astype(compute_dtype)
    b1p = jnp.zeros((1, f1p), jnp.float32).at[:, :f1].set(b1)
    w2xp = (jnp.zeros((f1p, f2p), jnp.float32).at[:f1, :f2].set(w2x)
            .astype(compute_dtype))
    w2ap = (jnp.zeros((A, f2p), jnp.float32).at[:, :f2].set(w2a)
            .astype(compute_dtype))
    b2p = jnp.zeros((1, f2p), jnp.float32).at[:, :f2].set(b2)
    w3p = jnp.zeros((1, f2p), jnp.float32).at[:, :f2].set(w3.T)
    b3p = b3.reshape(1).astype(jnp.float32)
    return (w1p, b1p, w2xp, w2ap, b2p, w3p, b3p)


def critic_reference(state, actions, params):
    """Pure-JAX reference of the PyTorch forward (unpadded, f32)."""
    w1, b1, w2x, w2a, b2, w3, b3 = params
    h1 = jnp.maximum(state @ w1 + b1, 0.0)
    h2 = jnp.maximum(h1 @ w2x + actions @ w2a + b2, 0.0)
    return h2 @ w3 + b3


if __name__ == "__main__":
    state_size = 32
    action_size = 4

    key = jax.random.PRNGKey(0)
    kp, ks, ka = jax.random.split(key, 3)

    params = init_params(kp, state_size, action_size)
    padded_f32 = pad_params(params, compute_dtype=jnp.float32)   # exact path
    padded_bf16 = pad_params(params)                             # default (bf16 MXU ops)

    # --- small-shape check (B=8), exact f32 path ---
    B = 8
    state = jax.random.normal(ks, (B, state_size), jnp.float32)
    actions = jax.random.normal(ka, (B, action_size), jnp.float32)

    q = critic_forward(state, actions, padded_f32)
    jax.block_until_ready(q)
    q_ref = critic_reference(state, actions, params)
    assert q.shape == (B, 1), q.shape
    np.testing.assert_allclose(np.asarray(q), np.asarray(q_ref),
                               rtol=1e-5, atol=1e-5)

    # --- batched check (B=300, not a tile multiple): exercises grid tiling
    #     (3 tiles of 128 after padding to 384), batch padding, resident
    #     weights across grid steps, and the transposed lane-dense output ---
    B2 = 300
    ks2, ka2 = jax.random.split(jax.random.PRNGKey(1))
    state2 = jax.random.normal(ks2, (B2, state_size), jnp.float32)
    actions2 = jax.random.normal(ka2, (B2, action_size), jnp.float32)

    q2 = critic_forward(state2, actions2, padded_f32)
    jax.block_until_ready(q2)
    q2_ref = critic_reference(state2, actions2, params)
    np.testing.assert_allclose(np.asarray(q2), np.asarray(q2_ref),
                               rtol=1e-5, atol=1e-5)

    # --- default bf16-operand path (f32 accumulation), looser tolerance ---
    q2_bf16 = critic_forward(state2, actions2, padded_bf16)
    jax.block_until_ready(q2_bf16)
    np.testing.assert_allclose(np.asarray(q2_bf16), np.asarray(q2_ref),
                               rtol=2e-2, atol=2e-2)

    print("KERNEL_OK")
</pallas_src>

<mosaic_0001>
module attributes {stable_mosaic.version = 11 : i64} {
  func.func @critic_kernel(%arg0: i32, %arg1: memref<8x32xf32, #tpu.memory_space<vmem>>, %arg2: memref<8x4xf32, #tpu.memory_space<vmem>>, %arg3: memref<32x512xf32, #tpu.memory_space<vmem>>, %arg4: memref<1x512xf32, #tpu.memory_space<vmem>>, %arg5: memref<512x384xf32, #tpu.memory_space<vmem>>, %arg6: memref<4x384xf32, #tpu.memory_space<vmem>>, %arg7: memref<1x384xf32, #tpu.memory_space<vmem>>, %arg8: memref<1x384xf32, #tpu.memory_space<vmem>>, %arg9: memref<1xf32, #tpu.memory_space<smem>>, %arg10: memref<1x1x8xf32, #tpu.memory_space<vmem>>) attributes {dimension_semantics = [#tpu.dimension_semantics<parallel>], iteration_bounds = array<i64: 1>, scalar_prefetch = 0 : i64, scratch_operands = 0 : i64, tpu.core_type = #tpu.core_type<tc>, window_params = [{transform_indices = @transform_0, window_bounds = array<i64: 8, 32>}, {transform_indices = @transform_1, window_bounds = array<i64: 8, 4>}, {pipeline_mode = #tpu.pipeline_mode<synchronous>, transform_indices = @transform_2, window_bounds = array<i64: 32, 512>}, {pipeline_mode = #tpu.pipeline_mode<synchronous>, transform_indices = @transform_3, window_bounds = array<i64: 1, 512>}, {pipeline_mode = #tpu.pipeline_mode<synchronous>, transform_indices = @transform_4, window_bounds = array<i64: 512, 384>}, {pipeline_mode = #tpu.pipeline_mode<synchronous>, transform_indices = @transform_5, window_bounds = array<i64: 4, 384>}, {pipeline_mode = #tpu.pipeline_mode<synchronous>, transform_indices = @transform_6, window_bounds = array<i64: 1, 384>}, {pipeline_mode = #tpu.pipeline_mode<synchronous>, transform_indices = @transform_7, window_bounds = array<i64: 1, 384>}, {transform_indices = @transform_8, window_bounds = array<i64: 1>}, {transform_indices = @transform_9, window_bounds = array<i64: 1, 1, 8>}]} {
    %c0 = arith.constant 0 : index
    %c0_0 = arith.constant 0 : index
    %0 = vector.load %arg1[%c0, %c0_0] : memref<8x32xf32, #tpu.memory_space<vmem>>, vector<8x32xf32>
    %c0_1 = arith.constant 0 : index
    %c0_2 = arith.constant 0 : index
    %1 = vector.load %arg2[%c0_1, %c0_2] : memref<8x4xf32, #tpu.memory_space<vmem>>, vector<8x4xf32>
    %c0_3 = arith.constant 0 : index
    %c0_4 = arith.constant 0 : index
    %2 = vector.load %arg3[%c0_3, %c0_4] : memref<32x512xf32, #tpu.memory_space<vmem>>, vector<32x512xf32>
    %cst = arith.constant dense<0.000000e+00> : vector<8x512xf32>
    %3 = tpu.matmul %0, %2, %cst {dimension_numbers = #tpu.dot_dimension_numbers<[1], [0], [0], [1], [0, 0, 1, 1], [], []>} : vector<8x32xf32>, vector<32x512xf32>, vector<8x512xf32> -> vector<8x512xf32>
    %c0_5 = arith.constant 0 : index
    %c0_6 = arith.constant 0 : index
    %4 = vector.load %arg4[%c0_5, %c0_6] : memref<1x512xf32, #tpu.memory_space<vmem>>, vector<1x512xf32>
    %5 = vector.broadcast %4 : vector<1x512xf32> to vector<8x512xf32>
    %6 = arith.addf %3, %5 : vector<8x512xf32>
    %cst_7 = arith.constant 0.000000e+00 : f32
    %7 = vector.broadcast %cst_7 : f32 to vector<8x512xf32>
    %8 = arith.maximumf %6, %7 : vector<8x512xf32>
    %c0_8 = arith.constant 0 : index
    %c0_9 = arith.constant 0 : index
    %9 = vector.load %arg5[%c0_8, %c0_9] : memref<512x384xf32, #tpu.memory_space<vmem>>, vector<512x384xf32>
    %cst_10 = arith.constant dense<0.000000e+00> : vector<8x384xf32>
    %10 = tpu.matmul %8, %9, %cst_10 {dimension_numbers = #tpu.dot_dimension_numbers<[1], [0], [0], [1], [0, 0, 1, 1], [], []>} : vector<8x512xf32>, vector<512x384xf32>, vector<8x384xf32> -> vector<8x384xf32>
    %c0_11 = arith.constant 0 : index
    %c0_12 = arith.constant 0 : index
    %11 = vector.load %arg6[%c0_11, %c0_12] : memref<4x384xf32, #tpu.memory_space<vmem>>, vector<4x384xf32>
    %cst_13 = arith.constant dense<0.000000e+00> : vector<8x384xf32>
    %12 = tpu.matmul %1, %11, %cst_13 {dimension_numbers = #tpu.dot_dimension_numbers<[1], [0], [0], [1], [0, 0, 1, 1], [], []>} : vector<8x4xf32>, vector<4x384xf32>, vector<8x384xf32> -> vector<8x384xf32>
    %13 = arith.addf %10, %12 : vector<8x384xf32>
    %c0_14 = arith.constant 0 : index
    %c0_15 = arith.constant 0 : index
    %14 = vector.load %arg7[%c0_14, %c0_15] : memref<1x384xf32, #tpu.memory_space<vmem>>, vector<1x384xf32>
    %15 = vector.broadcast %14 : vector<1x384xf32> to vector<8x384xf32>
    %16 = arith.addf %13, %15 : vector<8x384xf32>
    %cst_16 = arith.constant 0.000000e+00 : f32
    %17 = vector.broadcast %cst_16 : f32 to vector<8x384xf32>
    %18 = arith.maximumf %16, %17 : vector<8x384xf32>
    %c0_17 = arith.constant 0 : index
    %c0_18 = arith.constant 0 : index
    %19 = vector.load %arg8[%c0_17, %c0_18] : memref<1x384xf32, #tpu.memory_space<vmem>>, vector<1x384xf32>
    %20 = tpu.transpose %18, [1, 0] : vector<8x384xf32> -> vector<384x8xf32>
    %cst_19 = arith.constant dense<0.000000e+00> : vector<1x8xf32>
    %21 = tpu.matmul %19, %20, %cst_19 {dimension_numbers = #tpu.dot_dimension_numbers<[1], [0], [0], [1], [0, 0, 1, 1], [], []>} : vector<1x384xf32>, vector<384x8xf32>, vector<1x8xf32> -> vector<1x8xf32>
    %c0_20 = arith.constant 0 : index
    %22 = memref.load %arg9[%c0_20] : memref<1xf32, #tpu.memory_space<smem>>
    %23 = vector.broadcast %22 : f32 to vector<1x8xf32>
    %24 = arith.addf %21, %23 : vector<1x8xf32>
    %c0_21 = arith.constant 0 : index
    %c0_22 = arith.constant 0 : index
    %c0_23 = arith.constant 0 : index
    %25 = vector.load %arg10[%c0_21, %c0_22, %c0_23] : memref<1x1x8xf32, #tpu.memory_space<vmem>>, vector<1x1x8xf32>
    %26 = vector.shape_cast %25 : vector<1x1x8xf32> to vector<1x8xf32>
    %27 = vector.shape_cast %24 : vector<1x8xf32> to vector<1x1x8xf32>
    tpu.vector_store %arg10[%c0_21, %c0_22, %c0_23], %27 {strides = array<i32>} : memref<1x1x8xf32, #tpu.memory_space<vmem>>, vector<1x1x8xf32>,
    return
  }
  func.func @transform_0(%arg0: i32) -> (i32, i32) {
    %c0_i32 = arith.constant 0 : i32
    %c0_i32_0 = arith.constant 0 : i32
    return %arg0, %c0_i32 : i32, i32
  }
  func.func @transform_1(%arg0: i32) -> (i32, i32) {
    %c0_i32 = arith.constant 0 : i32
    %c0_i32_0 = arith.constant 0 : i32
    return %arg0, %c0_i32 : i32, i32
  }
  func.func @transform_2(%arg0: i32) -> (i32, i32) {
    %c0_i32 = arith.constant 0 : i32
    %c0_i32_0 = arith.constant 0 : i32
    %c0_i32_1 = arith.constant 0 : i32
    return %c0_i32, %c0_i32_0 : i32, i32
  }
  func.func @transform_3(%arg0: i32) -> (i32, i32) {
    %c0_i32 = arith.constant 0 : i32
    %c0_i32_0 = arith.constant 0 : i32
    %c0_i32_1 = arith.constant 0 : i32
    return %c0_i32, %c0_i32_0 : i32, i32
  }
  func.func @transform_4(%arg0: i32) -> (i32, i32) {
    %c0_i32 = arith.constant 0 : i32
    %c0_i32_0 = arith.constant 0 : i32
    %c0_i32_1 = arith.constant 0 : i32
    return %c0_i32, %c0_i32_0 : i32, i32
  }
  func.func @transform_5(%arg0: i32) -> (i32, i32) {
    %c0_i32 = arith.constant 0 : i32
    %c0_i32_0 = arith.constant 0 : i32
    %c0_i32_1 = arith.constant 0 : i32
    return %c0_i32, %c0_i32_0 : i32, i32
  }
  func.func @transform_6(%arg0: i32) -> (i32, i32) {
    %c0_i32 = arith.constant 0 : i32
    %c0_i32_0 = arith.constant 0 : i32
    %c0_i32_1 = arith.constant 0 : i32
    return %c0_i32, %c0_i32_0 : i32, i32
  }
  func.func @transform_7(%arg0: i32) -> (i32, i32) {
    %c0_i32 = arith.constant 0 : i32
    %c0_i32_0 = arith.constant 0 : i32
    %c0_i32_1 = arith.constant 0 : i32
    return %c0_i32, %c0_i32_0 : i32, i32
  }
  func.func @transform_8(%arg0: i32) -> i32 {
    %c0_i32 = arith.constant 0 : i32
    %c0_i32_0 = arith.constant 0 : i32
    return %c0_i32 : i32
  }
  func.func @transform_9(%arg0: i32) -> (i32, i32, i32) {
    %c0_i32 = arith.constant 0 : i32
    %c0_i32_0 = arith.constant 0 : i32
    %c0_i32_1 = arith.constant 0 : i32
    return %arg0, %c0_i32, %c0_i32_0 : i32, i32, i32
  }
}

</mosaic_0001>

<llo_original>
// kernel: tpu_custom_call.1
$region0: #{tpu_custom_call.1}
  #allocation0 [shape = 'u32[]', space=smem, size = 0x4, offset = 0x4, fixed_abs, tag = 'smem constant byte address 0x4 - core index']
  #allocation1 [shape = 'u32[144,128]{1,0:T(1,128)}', space=vmem, size = 0x12000, scoped, tag = 'internal scratch']
  #allocation2 [shape = 'f32[1]{0:T(128)S(6)}', space=smem, size = 0x200, scoped, tag = 'scoped memory for tpu_custom_call.1']
  %s0 = inlined_call_operand.vmem [shape: f32[8,32], index: 0, kind: input, shape index: {}]
  %s1 = inlined_call_operand.vmem [shape: f32[8,4], index: 1, kind: input, shape index: {}]
  %s2 = inlined_call_operand.hbm [shape: f32[32,512], index: 2, kind: input, shape index: {}]
  %s3 = inlined_call_operand.vmem [shape: f32[1,512], index: 3, kind: input, shape index: {}]
  %s4 = inlined_call_operand.hbm [shape: f32[512,384], index: 4, kind: input, shape index: {}]
  %s5 = inlined_call_operand.vmem [shape: f32[4,384], index: 5, kind: input, shape index: {}]
  %s6 = inlined_call_operand.vmem [shape: f32[1,384], index: 6, kind: input, shape index: {}]
  %s7 = inlined_call_operand.vmem [shape: f32[1,384], index: 7, kind: input, shape index: {}]
  %s8 = inlined_call_operand.<no memory space> [shape: f32[1], index: 8, kind: input, shape index: {}]
  %s9 = inlined_call_operand.hbm [shape: f32[1,1,8], index: 9, kind: output, shape index: {}]
  %s10 = sld [smem:[#allocation0]]
  $region54: #{tpu_custom_call.1} parent=0
    _
  %s12 = ssub.s32 1, %s10
  %s13 = scalar_select 0, %s12, %s10
  %14 = sst [smem:[#allocation2]] %s8
  $region1: #{tpu_custom_call.1} parent=0
    #allocation3 [shape = 'u8[65536]{0}', space=vmem, size = 0x10000, scoped, tag = 'input window, operand 2, single buffered']
    #allocation4 [shape = 's32[1]{0}', space=sflag, size = 0x4, scoped, tag = 'scoped memory for tpu_custom_call.1']
    #allocation5 [shape = 's32[1]{0}', space=sflag, size = 0x4, scoped, tag = 'scoped memory for tpu_custom_call.1']
    #allocation6 [shape = 'u8[786432]{0}', space=vmem, size = 0xc0000, scoped, tag = 'input window, operand 4, single buffered']
    #allocation7 [shape = 's32[1]{0}', space=sflag, size = 0x4, scoped, tag = 'scoped memory for tpu_custom_call.1']
    #allocation8 [shape = 'u8[512]{0}', space=vmem, size = 0x400, scoped, tag = 'output window, operand 0, single buffered']
    %15 = vsyncpa [#allocation4], 0
    %16 = vsyncpa [#allocation7], 0
    %17 = vsyncpa [#allocation5], 0
    // Predicated region
    $region2: #{tpu_custom_call.1} parent=1 // pred_check
      _
    $region3: #{tpu_custom_call.1} parent=1 // pred_check_branch
      %19 = sbr.rel (0) target = $region5
    $region4: #{tpu_custom_call.1} parent=1 // pred_region
      _
    $region5: #{tpu_custom_call.1} parent=1 // pred_fallthru
      _
    // Predicated region
    $region6: #{tpu_custom_call.1} parent=1 // pred_check
      _
    $region7: #{tpu_custom_call.1} parent=1 // pred_check_branch
      %21 = sbr.rel (0) target = $region9
    $region8: #{tpu_custom_call.1} parent=1 // pred_region
      _
    $region9: #{tpu_custom_call.1} parent=1 // pred_fallthru
      _
    // Predicated region
    $region10: #{tpu_custom_call.1} parent=1 // pred_check
      _
    $region11: #{tpu_custom_call.1} parent=1 // pred_check_branch
      %23 = sbr.rel (0) target = $region13
    $region12: #{tpu_custom_call.1} parent=1 // pred_region
      %s25 = ssub.s32 2048, 2048
      %26 = vsyncadd [#allocation4], %s25
      %s27 = sshll.u32 [#allocation3], 4
      %s28 = int_to_ptr.vmem [resolvable:$true] %s27
      %33 = dma.hbm_to_vmem [thread:$0]  %s2, 2048, %s28, [#allocation4], 512, 512, 32
    $region13: #{tpu_custom_call.1} parent=1 // pred_fallthru
      _
    // Predicated region
    $region14: #{tpu_custom_call.1} parent=1 // pred_check
      _
    $region15: #{tpu_custom_call.1} parent=1 // pred_check_branch
      %35 = sbr.rel (0) target = $region17
    $region16: #{tpu_custom_call.1} parent=1 // pred_region
      _
    $region17: #{tpu_custom_call.1} parent=1 // pred_fallthru
      _
    // Predicated region
    $region18: #{tpu_custom_call.1} parent=1 // pred_check
      _
    $region19: #{tpu_custom_call.1} parent=1 // pred_check_branch
      %37 = sbr.rel (0) target = $region21
    $region20: #{tpu_custom_call.1} parent=1 // pred_region
      %s39 = ssub.s32 24576, 24576
      %40 = vsyncadd [#allocation7], %s39
      %s41 = sshll.u32 [#allocation6], 4
      %s42 = int_to_ptr.vmem [resolvable:$true] %s41
      %47 = dma.hbm_to_vmem [thread:$0]  %s4, 24576, %s42, [#allocation7], 384, 384, 24
    $region21: #{tpu_custom_call.1} parent=1 // pred_fallthru
      _
    // Predicated region
    $region22: #{tpu_custom_call.1} parent=1 // pred_check
      _
    $region23: #{tpu_custom_call.1} parent=1 // pred_check_branch
      %49 = sbr.rel (0) target = $region25
    $region24: #{tpu_custom_call.1} parent=1 // pred_region
      _
    $region25: #{tpu_custom_call.1} parent=1 // pred_fallthru
      _
    // Predicated region
    $region26: #{tpu_custom_call.1} parent=1 // pred_check
      _
    $region27: #{tpu_custom_call.1} parent=1 // pred_check_branch
      %51 = sbr.rel (0) target = $region29
    $region28: #{tpu_custom_call.1} parent=1 // pred_region
      _
    $region29: #{tpu_custom_call.1} parent=1 // pred_fallthru
      _
    // Predicated region
    $region30: #{tpu_custom_call.1} parent=1 // pred_check
      _
    $region31: #{tpu_custom_call.1} parent=1 // pred_check_branch
      %53 = sbr.rel (0) target = $region33
    $region32: #{tpu_custom_call.1} parent=1 // pred_region
      _
    $region33: #{tpu_custom_call.1} parent=1 // pred_fallthru
      _
    // Predicated region
    $region34: #{tpu_custom_call.1} parent=1 // pred_check
      _
    $region35: #{tpu_custom_call.1} parent=1 // pred_check_branch
      %55 = sbr.rel (0) target = $region37
    $region36: #{tpu_custom_call.1} parent=1 // pred_region
      _
    $region37: #{tpu_custom_call.1} parent=1 // pred_fallthru
      _
    // Predicated region
    $region38: #{tpu_custom_call.1} parent=1 // pred_check
      _
    $region39: #{tpu_custom_call.1} parent=1 // pred_check_branch
      %57 = sbr.rel (0) target = $region41
    $region40: #{tpu_custom_call.1} parent=1 // pred_region
      %58 = dma.done [#allocation4], 2048
    $region41: #{tpu_custom_call.1} parent=1 // pred_fallthru
      _
    // Predicated region
    $region42: #{tpu_custom_call.1} parent=1 // pred_check
      _
    $region43: #{tpu_custom_call.1} parent=1 // pred_check_branch
      %60 = sbr.rel (0) target = $region45
    $region44: #{tpu_custom_call.1} parent=1 // pred_region
      %61 = dma.done [#allocation7], 24576
    $region45: #{tpu_custom_call.1} parent=1 // pred_fallthru
      _
    %v62 = vld [vmem:[%s0] sm:$0xff]
    %v63 = vld [vmem:[%s1] sm:$0xff]
    %v64 = vld [vmem:[#allocation3] sm:$0xff]
    %v65 = vld [vmem:[#allocation3 + $0x8] sm:$0xff]
    %v66 = vld [vmem:[#allocation3 + $0x10] sm:$0xff]
    %v67 = vld [vmem:[#allocation3 + $0x18] sm:$0xff]
    %v68 = vld [vmem:[#allocation3 + $0x20] sm:$0xff]
    %v69 = vld [vmem:[#allocation3 + $0x28] sm:$0xff]
    %v70 = vld [vmem:[#allocation3 + $0x30] sm:$0xff]
    %v71 = vld [vmem:[#allocation3 + $0x38] sm:$0xff]
    %v72 = vld [vmem:[#allocation3 + $0x40] sm:$0xff]
    %v73 = vld [vmem:[#allocation3 + $0x48] sm:$0xff]
    %v74 = vld [vmem:[#allocation3 + $0x50] sm:$0xff]
    %v75 = vld [vmem:[#allocation3 + $0x58] sm:$0xff]
    %v76 = vld [vmem:[#allocation3 + $0x60] sm:$0xff]
    %v77 = vld [vmem:[#allocation3 + $0x68] sm:$0xff]
    %v78 = vld [vmem:[#allocation3 + $0x70] sm:$0xff]
    %v79 = vld [vmem:[#allocation3 + $0x78] sm:$0xff]
    %v80 = vld [vmem:[%s3] sm:$0xf]
    %v82 = vlaneseq
    %v83 = vshrl.u32 %v82, 7
    %v84 = vsub.s32 0, %v83
    %v85 = vrot.slane %v80, %v84
    %v86 = vlaneseq
    %v87 = vshrl.u32 %v86, 7
    %v88 = vsub.s32 1, %v87
    %v89 = vrot.slane %v80, %v88
    %v90 = vlaneseq
    %v91 = vshrl.u32 %v90, 7
    %v92 = vsub.s32 2, %v91
    %v93 = vrot.slane %v80, %v92
    %v94 = vlaneseq
    %v95 = vshrl.u32 %v94, 7
    %v96 = vsub.s32 3, %v95
    %v97 = vrot.slane %v80, %v96
    %vm102 = vcmask 261120
    %v104 = vsel %vm102, %v62, 0
    %106 = vmatprep.subr.mxu0 %v65
    %107 = vmatpush1.msra.mxu0 %v64
    %108 = vmatprep.subr.mxu0 %v69
    %109 = vmatpush1.msra.mxu0 %v68
    %110 = vmatprep.subr.mxu0 %v73
    %111 = vmatpush1.msra.mxu0 %v72
    %112 = vmatprep.subr.mxu0 %v77
    %113 = vmatpush1.msra.mxu0 %v76
    %114 = vmatprep.subr.mxu0 0.0
    %115 = vmatpush1.msra.mxu0 0.0
    %116 = vmatprep.subr.mxu0 0.0
    %117 = vmatpush1.msra.mxu0 0.0
    %118 = vmatprep.subr.mxu0 0.0
    %119 = vmatpush1.msra.mxu0 0.0
    %120 = vmatprep.subr.mxu0 0.0
    %121 = vmatpush1.msra.mxu0 0.0
    %122 = vmatprep.subr.mxu0 0.0
    %123 = vmatpush1.msra.mxu0 0.0
    %124 = vmatprep.subr.mxu0 0.0
    %125 = vmatpush1.msra.mxu0 0.0
    %126 = vmatprep.subr.mxu0 0.0
    %127 = vmatpush1.msra.mxu0 0.0
    %128 = vmatprep.subr.mxu0 0.0
    %129 = vmatpush1.msra.mxu0 0.0
    %130 = vmatprep.subr.mxu0 0.0
    %131 = vmatpush1.msra.mxu0 0.0
    %132 = vmatprep.subr.mxu0 0.0
    %133 = vmatpush1.msra.mxu0 0.0
    %134 = vmatprep.subr.mxu0 0.0
    %135 = vmatpush1.msra.mxu0 0.0
    %136 = vmatprep.subr.mxu0 0.0
    %137 = vmatpush1.msra.mxu0 0.0
    %138 = vmatprep.subr.mxu0 0.0
    %139 = vmatpush1.msra.mxu0 0.0
    %140 = vmatprep.subr.mxu0 0.0
    %141 = vmatpush1.msra.mxu0 0.0
    %142 = vmatprep.subr.mxu0 0.0
    %143 = vmatpush1.msra.mxu0 0.0
    %144 = vmatprep.subr.mxu0 0.0
    %145 = vmatpush1.msra.mxu0 0.0
    %146 = vmatprep.subr.mxu0 0.0
    %147 = vmatpush1.msra.mxu0 0.0
    %148 = vmatprep.subr.mxu0 0.0
    %149 = vmatpush1.msra.mxu0 0.0
    %150 = vmatprep.subr.mxu0 0.0
    %151 = vmatpush1.msra.mxu0 0.0
    %152 = vmatprep.subr.mxu0 0.0
    %153 = vmatpush1.msra.mxu0 0.0
    %154 = vmatprep.subr.mxu0 0.0
    %155 = vmatpush1.msra.mxu0 0.0
    %156 = vmatprep.subr.mxu0 0.0
    %157 = vmatpush1.msra.mxu0 0.0
    %158 = vmatprep.subr.mxu0 0.0
    %159 = vmatpush1.msra.mxu0 0.0
    %160 = vmatprep.subr.mxu0 0.0
    %161 = vmatpush1.msra.mxu0 0.0
    %162 = vmatprep.subr.mxu0 0.0
    %163 = vmatpush1.msra.mxu0 0.0
    %164 = vmatprep.subr.mxu0 0.0
    %165 = vmatpush1.msra.mxu0 0.0
    %166 = vmatprep.subr.mxu0 0.0
    %167 = vmatpush1.msra.mxu0 0.0
    %168 = vmatprep.subr.mxu0 0.0
    %169 = vmatpush1.msra.mxu0 0.0
    %170 = vmatprep.mubr.f32.mxu0 0.0
    %171 = vmatmul.mubr.f32.gmra.mrb[0].mxu0 %v104
    %v172 = vpop.f32.mrb[0].mxu0
    %v173 = vadd.f32 %v85, %v172
    %v174 = vpop.f32.mrb[0].mxu0
    %v175 = vadd.f32 %v89, %v174
    %176 = vdwg.mxu0
    %177 = vmatprep.subr.mxu0 %v67
    %178 = vmatpush1.msra.mxu0 %v66
    %179 = vmatprep.subr.mxu0 %v71
    %180 = vmatpush1.msra.mxu0 %v70
    %181 = vmatprep.subr.mxu0 %v75
    %182 = vmatpush1.msra.mxu0 %v74
    %183 = vmatprep.subr.mxu0 %v79
    %184 = vmatpush1.msra.mxu0 %v78
    %185 = vmatprep.subr.mxu0 0.0
    %186 = vmatpush1.msra.mxu0 0.0
    %187 = vmatprep.subr.mxu0 0.0
    %188 = vmatpush1.msra.mxu0 0.0
    %189 = vmatprep.subr.mxu0 0.0
    %190 = vmatpush1.msra.mxu0 0.0
    %191 = vmatprep.subr.mxu0 0.0
    %192 = vmatpush1.msra.mxu0 0.0
    %193 = vmatprep.subr.mxu0 0.0
    %194 = vmatpush1.msra.mxu0 0.0
    %195 = vmatprep.subr.mxu0 0.0
    %196 = vmatpush1.msra.mxu0 0.0
    %197 = vmatprep.subr.mxu0 0.0
    %198 = vmatpush1.msra.mxu0 0.0
    %199 = vmatprep.subr.mxu0 0.0
    %200 = vmatpush1.msra.mxu0 0.0
    %201 = vmatprep.subr.mxu0 0.0
    %202 = vmatpush1.msra.mxu0 0.0
    %203 = vmatprep.subr.mxu0 0.0
    %204 = vmatpush1.msra.mxu0 0.0
    %205 = vmatprep.subr.mxu0 0.0
    %206 = vmatpush1.msra.mxu0 0.0
    %207 = vmatprep.subr.mxu0 0.0
    %208 = vmatpush1.msra.mxu0 0.0
    %209 = vmatprep.subr.mxu0 0.0
    %210 = vmatpush1.msra.mxu0 0.0
    %211 = vmatprep.subr.mxu0 0.0
    %212 = vmatpush1.msra.mxu0 0.0
    %213 = vmatprep.subr.mxu0 0.0
    %214 = vmatpush1.msra.mxu0 0.0
    %215 = vmatprep.subr.mxu0 0.0
    %216 = vmatpush1.msra.mxu0 0.0
    %217 = vmatprep.subr.mxu0 0.0
    %218 = vmatpush1.msra.mxu0 0.0
    %219 = vmatprep.subr.mxu0 0.0
    %220 = vmatpush1.msra.mxu0 0.0
    %221 = vmatprep.subr.mxu0 0.0
    %222 = vmatpush1.msra.mxu0 0.0
    %223 = vmatprep.subr.mxu0 0.0
    %224 = vmatpush1.msra.mxu0 0.0
    %225 = vmatprep.subr.mxu0 0.0
    %226 = vmatpush1.msra.mxu0 0.0
    %227 = vmatprep.subr.mxu0 0.0
    %228 = vmatpush1.msra.mxu0 0.0
    %229 = vmatprep.subr.mxu0 0.0
    %230 = vmatpush1.msra.mxu0 0.0
    %231 = vmatprep.subr.mxu0 0.0
    %232 = vmatpush1.msra.mxu0 0.0
    %233 = vmatprep.subr.mxu0 0.0
    %234 = vmatpush1.msra.mxu0 0.0
    %235 = vmatprep.subr.mxu0 0.0
    %236 = vmatpush1.msra.mxu0 0.0
    %237 = vmatprep.subr.mxu0 0.0
    %238 = vmatpush1.msra.mxu0 0.0
    %239 = vmatprep.subr.mxu0 0.0
    %240 = vmatpush1.msra.mxu0 0.0
    %241 = vmatprep.mubr.f32.mxu0 0.0
    %242 = vmatmul.mubr.f32.gmra.mrb[0].mxu0 %v104
    %v243 = vpop.f32.mrb[0].mxu0
    %v244 = vadd.f32 %v93, %v243
    %v245 = vpop.f32.mrb[0].mxu0
    %v246 = vadd.f32 %v97, %v245
    %247 = vdwg.mxu0
    %v248 = vmax.f32 %v173, 0.0
    %v249 = vmax.f32 %v175, 0.0
    %v250 = vmax.f32 %v244, 0.0
    %v251 = vmax.f32 %v246, 0.0
    %v252 = vld [vmem:[#allocation6] sm:$0xff]
    %v253 = vld [vmem:[#allocation6 + $0x8] sm:$0xff]
    %v254 = vld [vmem:[#allocation6 + $0x10] sm:$0xff]
    %v255 = vld [vmem:[#allocation6 + $0x18] sm:$0xff]
    %v256 = vld [vmem:[#allocation6 + $0x20] sm:$0xff]
    %v257 = vld [vmem:[#allocation6 + $0x28] sm:$0xff]
    %v258 = vld [vmem:[#allocation6 + $0x30] sm:$0xff]
    %v259 = vld [vmem:[#allocation6 + $0x38] sm:$0xff]
    %v260 = vld [vmem:[#allocation6 + $0x40] sm:$0xff]
    %v261 = vld [vmem:[#allocation6 + $0x48] sm:$0xff]
    %v262 = vld [vmem:[#allocation6 + $0x50] sm:$0xff]
    %v263 = vld [vmem:[#allocation6 + $0x58] sm:$0xff]
    %v264 = vld [vmem:[#allocation6 + $0x60] sm:$0xff]
    %v265 = vld [vmem:[#allocation6 + $0x68] sm:$0xff]
    %v266 = vld [vmem:[#allocation6 + $0x70] sm:$0xff]
    %v267 = vld [vmem:[#allocation6 + $0x78] sm:$0xff]
    %v268 = vld [vmem:[#allocation6 + $0x80] sm:$0xff]
    %v269 = vld [vmem:[#allocation6 + $0x88] sm:$0xff]
    %v270 = vld [vmem:[#allocation6 + $0x90] sm:$0xff]
    %v271 = vld [vmem:[#allocation6 + $0x98] sm:$0xff]
    %v272 = vld [vmem:[#allocation6 + $0xa0] sm:$0xff]
    %v273 = vld [vmem:[#allocation6 + $0xa8] sm:$0xff]
    %v274 = vld [vmem:[#allocation6 + $0xb0] sm:$0xff]
    %v275 = vld [vmem:[#allocation6 + $0xb8] sm:$0xff]
    %v276 = vld [vmem:[#allocation6 + $0xc0] sm:$0xff]
    %v277 = vld [vmem:[#allocation6 + $0xc8] sm:$0xff]
    %v278 = vld [vmem:[#allocation6 + $0xd0] sm:$0xff]
    %v279 = vld [vmem:[#allocation6 + $0xd8] sm:$0xff]
    %v280 = vld [vmem:[#allocation6 + $0xe0] sm:$0xff]
    %v281 = vld [vmem:[#allocation6 + $0xe8] sm:$0xff]
    %v282 = vld [vmem:[#allocation6 + $0xf0] sm:$0xff]
    %v283 = vld [vmem:[#allocation6 + $0xf8] sm:$0xff]
    %v284 = vld [vmem:[#allocation6 + $0x100] sm:$0xff]
    %v285 = vld [vmem:[#allocation6 + $0x108] sm:$0xff]
    %v286 = vld [vmem:[#allocation6 + $0x110] sm:$0xff]
    %v287 = vld [vmem:[#allocation6 + $0x118] sm:$0xff]
    %v288 = vld [vmem:[#allocation6 + $0x120] sm:$0xff]
    %v289 = vld [vmem:[#allocation6 + $0x128] sm:$0xff]
    %v290 = vld [vmem:[#allocation6 + $0x130] sm:$0xff]
    %v291 = vld [vmem:[#allocation6 + $0x138] sm:$0xff]
    %v292 = vld [vmem:[#allocation6 + $0x140] sm:$0xff]
    %v293 = vld [vmem:[#allocation6 + $0x148] sm:$0xff]
    %v294 = vld [vmem:[#allocation6 + $0x150] sm:$0xff]
    %v295 = vld [vmem:[#allocation6 + $0x158] sm:$0xff]
    %v296 = vld [vmem:[#allocation6 + $0x160] sm:$0xff]
    %v297 = vld [vmem:[#allocation6 + $0x168] sm:$0xff]
    %v298 = vld [vmem:[#allocation6 + $0x170] sm:$0xff]
    %v299 = vld [vmem:[#allocation6 + $0x178] sm:$0xff]
    %v300 = vld [vmem:[#allocation6 + $0x180] sm:$0xff]
    %v301 = vld [vmem:[#allocation6 + $0x188] sm:$0xff]
    %v302 = vld [vmem:[#allocation6 + $0x190] sm:$0xff]
    %v303 = vld [vmem:[#allocation6 + $0x198] sm:$0xff]
    %v304 = vld [vmem:[#allocation6 + $0x1a0] sm:$0xff]
    %v305 = vld [vmem:[#allocation6 + $0x1a8] sm:$0xff]
    %v306 = vld [vmem:[#allocation6 + $0x1b0] sm:$0xff]
    %v307 = vld [vmem:[#allocation6 + $0x1b8] sm:$0xff]
    %v308 = vld [vmem:[#allocation6 + $0x1c0] sm:$0xff]
    %v309 = vld [vmem:[#allocation6 + $0x1c8] sm:$0xff]
    %v310 = vld [vmem:[#allocation6 + $0x1d0] sm:$0xff]
    %v311 = vld [vmem:[#allocation6 + $0x1d8] sm:$0xff]
    %v312 = vld [vmem:[#allocation6 + $0x1e0] sm:$0xff]
    %v313 = vld [vmem:[#allocation6 + $0x1e8] sm:$0xff]
    %v314 = vld [vmem:[#allocation6 + $0x1f0] sm:$0xff]
    %v315 = vld [vmem:[#allocation6 + $0x1f8] sm:$0xff]
    %v316 = vld [vmem:[#allocation6 + $0x200] sm:$0xff]
    %v317 = vld [vmem:[#allocation6 + $0x208] sm:$0xff]
    %v318 = vld [vmem:[#allocation6 + $0x210] sm:$0xff]
    %v319 = vld [vmem:[#allocation6 + $0x218] sm:$0xff]
    %v320 = vld [vmem:[#allocation6 + $0x220] sm:$0xff]
    %v321 = vld [vmem:[#allocation6 + $0x228] sm:$0xff]
    %v322 = vld [vmem:[#allocation6 + $0x230] sm:$0xff]
    %v323 = vld [vmem:[#allocation6 + $0x238] sm:$0xff]
    %v324 = vld [vmem:[#allocation6 + $0x240] sm:$0xff]
    %v325 = vld [vmem:[#allocation6 + $0x248] sm:$0xff]
    %v326 = vld [vmem:[#allocation6 + $0x250] sm:$0xff]
    %v327 = vld [vmem:[#allocation6 + $0x258] sm:$0xff]
    %v328 = vld [vmem:[#allocation6 + $0x260] sm:$0xff]
    %v329 = vld [vmem:[#allocation6 + $0x268] sm:$0xff]
    %v330 = vld [vmem:[#allocation6 + $0x270] sm:$0xff]
    %v331 = vld [vmem:[#allocation6 + $0x278] sm:$0xff]
    %v332 = vld [vmem:[#allocation6 + $0x280] sm:$0xff]
    %v333 = vld [vmem:[#allocation6 + $0x288] sm:$0xff]
    %v334 = vld [vmem:[#allocation6 + $0x290] sm:$0xff]
    %v335 = vld [vmem:[#allocation6 + $0x298] sm:$0xff]
    %v336 = vld [vmem:[#allocation6 + $0x2a0] sm:$0xff]
    %v337 = vld [vmem:[#allocation6 + $0x2a8] sm:$0xff]
    %v338 = vld [vmem:[#allocation6 + $0x2b0] sm:$0xff]
    %v339 = vld [vmem:[#allocation6 + $0x2b8] sm:$0xff]
    %v340 = vld [vmem:[#allocation6 + $0x2c0] sm:$0xff]
    %v341 = vld [vmem:[#allocation6 + $0x2c8] sm:$0xff]
    %v342 = vld [vmem:[#allocation6 + $0x2d0] sm:$0xff]
    %v343 = vld [vmem:[#allocation6 + $0x2d8] sm:$0xff]
    %v344 = vld [vmem:[#allocation6 + $0x2e0] sm:$0xff]
    %v345 = vld [vmem:[#allocation6 + $0x2e8] sm:$0xff]
    %v346 = vld [vmem:[#allocation6 + $0x2f0] sm:$0xff]
    %v347 = vld [vmem:[#allocation6 + $0x2f8] sm:$0xff]
    %v348 = vld [vmem:[#allocation6 + $0x300] sm:$0xff]
    %v349 = vld [vmem:[#allocation6 + $0x308] sm:$0xff]
    %v350 = vld [vmem:[#allocation6 + $0x310] sm:$0xff]
    %v351 = vld [vmem:[#allocation6 + $0x318] sm:$0xff]
    %v352 = vld [vmem:[#allocation6 + $0x320] sm:$0xff]
    %v353 = vld [vmem:[#allocation6 + $0x328] sm:$0xff]
    %v354 = vld [vmem:[#allocation6 + $0x330] sm:$0xff]
    %v355 = vld [vmem:[#allocation6 + $0x338] sm:$0xff]
    %v356 = vld [vmem:[#allocation6 + $0x340] sm:$0xff]
    %v357 = vld [vmem:[#allocation6 + $0x348] sm:$0xff]
    %v358 = vld [vmem:[#allocation6 + $0x350] sm:$0xff]
    %v359 = vld [vmem:[#allocation6 + $0x358] sm:$0xff]
    %v360 = vld [vmem:[#allocation6 + $0x360] sm:$0xff]
    %v361 = vld [vmem:[#allocation6 + $0x368] sm:$0xff]
    %v362 = vld [vmem:[#allocation6 + $0x370] sm:$0xff]
    %v363 = vld [vmem:[#allocation6 + $0x378] sm:$0xff]
    %v364 = vld [vmem:[#allocation6 + $0x380] sm:$0xff]
    %v365 = vld [vmem:[#allocation6 + $0x388] sm:$0xff]
    %v366 = vld [vmem:[#allocation6 + $0x390] sm:$0xff]
    %v367 = vld [vmem:[#allocation6 + $0x398] sm:$0xff]
    %v368 = vld [vmem:[#allocation6 + $0x3a0] sm:$0xff]
    %v369 = vld [vmem:[#allocation6 + $0x3a8] sm:$0xff]
    %v370 = vld [vmem:[#allocation6 + $0x3b0] sm:$0xff]
    %v371 = vld [vmem:[#allocation6 + $0x3b8] sm:$0xff]
    %v372 = vld [vmem:[#allocation6 + $0x3c0] sm:$0xff]
    %v373 = vld [vmem:[#allocation6 + $0x3c8] sm:$0xff]
    %v374 = vld [vmem:[#allocation6 + $0x3d0] sm:$0xff]
    %v375 = vld [vmem:[#allocation6 + $0x3d8] sm:$0xff]
    %v376 = vld [vmem:[#allocation6 + $0x3e0] sm:$0xff]
    %v377 = vld [vmem:[#allocation6 + $0x3e8] sm:$0xff]
    %v378 = vld [vmem:[#allocation6 + $0x3f0] sm:$0xff]
    %v379 = vld [vmem:[#allocation6 + $0x3f8] sm:$0xff]
    %v380 = vld [vmem:[#allocation6 + $0x400] sm:$0xff]
    %v381 = vld [vmem:[#allocation6 + $0x408] sm:$0xff]
    %v382 = vld [vmem:[#allocation6 + $0x410] sm:$0xff]
    %v383 = vld [vmem:[#allocation6 + $0x418] sm:$0xff]
    %v384 = vld [vmem:[#allocation6 + $0x420] sm:$0xff]
    %v385 = vld [vmem:[#allocation6 + $0x428] sm:$0xff]
    %v386 = vld [vmem:[#allocation6 + $0x430] sm:$0xff]
    %v387 = vld [vmem:[#allocation6 + $0x438] sm:$0xff]
    %v388 = vld [vmem:[#allocation6 + $0x440] sm:$0xff]
    %v389 = vld [vmem:[#allocation6 + $0x448] sm:$0xff]
    %v390 = vld [vmem:[#allocation6 + $0x450] sm:$0xff]
    %v391 = vld [vmem:[#allocation6 + $0x458] sm:$0xff]
    %v392 = vld [vmem:[#allocation6 + $0x460] sm:$0xff]
    %v393 = vld [vmem:[#allocation6 + $0x468] sm:$0xff]
    %v394 = vld [vmem:[#allocation6 + $0x470] sm:$0xff]
    %v395 = vld [vmem:[#allocation6 + $0x478] sm:$0xff]
    %v396 = vld [vmem:[#allocation6 + $0x480] sm:$0xff]
    %v397 = vld [vmem:[#allocation6 + $0x488] sm:$0xff]
    %v398 = vld [vmem:[#allocation6 + $0x490] sm:$0xff]
    %v399 = vld [vmem:[#allocation6 + $0x498] sm:$0xff]
    %v400 = vld [vmem:[#allocation6 + $0x4a0] sm:$0xff]
    %v401 = vld [vmem:[#allocation6 + $0x4a8] sm:$0xff]
    %v402 = vld [vmem:[#allocation6 + $0x4b0] sm:$0xff]
    %v403 = vld [vmem:[#allocation6 + $0x4b8] sm:$0xff]
    %v404 = vld [vmem:[#allocation6 + $0x4c0] sm:$0xff]
    %v405 = vld [vmem:[#allocation6 + $0x4c8] sm:$0xff]
    %v406 = vld [vmem:[#allocation6 + $0x4d0] sm:$0xff]
    %v407 = vld [vmem:[#allocation6 + $0x4d8] sm:$0xff]
    %v408 = vld [vmem:[#allocation6 + $0x4e0] sm:$0xff]
    %v409 = vld [vmem:[#allocation6 + $0x4e8] sm:$0xff]
    %v410 = vld [vmem:[#allocation6 + $0x4f0] sm:$0xff]
    %v411 = vld [vmem:[#allocation6 + $0x4f8] sm:$0xff]
    %v412 = vld [vmem:[#allocation6 + $0x500] sm:$0xff]
    %v413 = vld [vmem:[#allocation6 + $0x508] sm:$0xff]
    %v414 = vld [vmem:[#allocation6 + $0x510] sm:$0xff]
    %v415 = vld [vmem:[#allocation6 + $0x518] sm:$0xff]
    %v416 = vld [vmem:[#allocation6 + $0x520] sm:$0xff]
    %v417 = vld [vmem:[#allocation6 + $0x528] sm:$0xff]
    %v418 = vld [vmem:[#allocation6 + $0x530] sm:$0xff]
    %v419 = vld [vmem:[#allocation6 + $0x538] sm:$0xff]
    %v420 = vld [vmem:[#allocation6 + $0x540] sm:$0xff]
    %v421 = vld [vmem:[#allocation6 + $0x548] sm:$0xff]
    %v422 = vld [vmem:[#allocation6 + $0x550] sm:$0xff]
    %v423 = vld [vmem:[#allocation6 + $0x558] sm:$0xff]
    %v424 = vld [vmem:[#allocation6 + $0x560] sm:$0xff]
    %v425 = vld [vmem:[#allocation6 + $0x568] sm:$0xff]
    %v426 = vld [vmem:[#allocation6 + $0x570] sm:$0xff]
    %v427 = vld [vmem:[#allocation6 + $0x578] sm:$0xff]
    %v428 = vld [vmem:[#allocation6 + $0x580] sm:$0xff]
    %v429 = vld [vmem:[#allocation6 + $0x588] sm:$0xff]
    %v430 = vld [vmem:[#allocation6 + $0x590] sm:$0xff]
    %v431 = vld [vmem:[#allocation6 + $0x598] sm:$0xff]
    %v432 = vld [vmem:[#allocation6 + $0x5a0] sm:$0xff]
    %v433 = vld [vmem:[#allocation6 + $0x5a8] sm:$0xff]
    %v434 = vld [vmem:[#allocation6 + $0x5b0] sm:$0xff]
    %v435 = vld [vmem:[#allocation6 + $0x5b8] sm:$0xff]
    %v436 = vld [vmem:[#allocation6 + $0x5c0] sm:$0xff]
    %v437 = vld [vmem:[#allocation6 + $0x5c8] sm:$0xff]
    %v438 = vld [vmem:[#allocation6 + $0x5d0] sm:$0xff]
    %v439 = vld [vmem:[#allocation6 + $0x5d8] sm:$0xff]
    %v440 = vld [vmem:[#allocation6 + $0x5e0] sm:$0xff]
    %v441 = vld [vmem:[#allocation6 + $0x5e8] sm:$0xff]
    %v442 = vld [vmem:[#allocation6 + $0x5f0] sm:$0xff]
    %v443 = vld [vmem:[#allocation6 + $0x5f8] sm:$0xff]
    %v444 = vld [vmem:[%s5] sm:$0xff]
    %v445 = vld [vmem:[%s5 + $0x8] sm:$0xf]
    %v448 = vcombine.high %v444, %v444
    %vm449 = vcmask 31744
    %v451 = vsel %vm449, %v63, 0
    %vm453 = vcmask 1043456
    %v454 = vsel %vm453, %v444, 0
    %v456 = vsel %vm453, %v448, 0
    %v458 = vsel %vm453, %v445, 0
    %460 = vmatprep.subr.mxu0 %v456
    %461 = vmatpush1.msra.mxu0 %v454
    %462 = vmatprep.subr.mxu0 0.0
    %463 = vmatpush1.msra.mxu0 0.0
    %464 = vmatprep.subr.mxu0 0.0
    %465 = vmatpush1.msra.mxu0 0.0
    %466 = vmatprep.subr.mxu0 0.0
    %467 = vmatpush1.msra.mxu0 0.0
    %468 = vmatprep.subr.mxu0 0.0
    %469 = vmatpush1.msra.mxu0 0.0
    %470 = vmatprep.subr.mxu0 0.0
    %471 = vmatpush1.msra.mxu0 0.0
    %472 = vmatprep.subr.mxu0 0.0
    %473 = vmatpush1.msra.mxu0 0.0
    %474 = vmatprep.subr.mxu0 0.0
    %475 = vmatpush1.msra.mxu0 0.0
    %476 = vmatprep.subr.mxu0 0.0
    %477 = vmatpush1.msra.mxu0 0.0
    %478 = vmatprep.subr.mxu0 0.0
    %479 = vmatpush1.msra.mxu0 0.0
    %480 = vmatprep.subr.mxu0 0.0
    %481 = vmatpush1.msra.mxu0 0.0
    %482 = vmatprep.subr.mxu0 0.0
    %483 = vmatpush1.msra.mxu0 0.0
    %484 = vmatprep.subr.mxu0 0.0
    %485 = vmatpush1.msra.mxu0 0.0
    %486 = vmatprep.subr.mxu0 0.0
    %487 = vmatpush1.msra.mxu0 0.0
    %488 = vmatprep.subr.mxu0 0.0
    %489 = vmatpush1.msra.mxu0 0.0
    %490 = vmatprep.subr.mxu0 0.0
    %491 = vmatpush1.msra.mxu0 0.0
    %492 = vmatprep.subr.mxu0 0.0
    %493 = vmatpush1.msra.mxu0 0.0
    %494 = vmatprep.subr.mxu0 0.0
    %495 = vmatpush1.msra.mxu0 0.0
    %496 = vmatprep.subr.mxu0 0.0
    %497 = vmatpush1.msra.mxu0 0.0
    %498 = vmatprep.subr.mxu0 0.0
    %499 = vmatpush1.msra.mxu0 0.0
    %500 = vmatprep.subr.mxu0 0.0
    %501 = vmatpush1.msra.mxu0 0.0
    %502 = vmatprep.subr.mxu0 0.0
    %503 = vmatpush1.msra.mxu0 0.0
    %504 = vmatprep.subr.mxu0 0.0
    %505 = vmatpush1.msra.mxu0 0.0
    %506 = vmatprep.subr.mxu0 0.0
    %507 = vmatpush1.msra.mxu0 0.0
    %508 = vmatprep.subr.mxu0 0.0
    %509 = vmatpush1.msra.mxu0 0.0
    %510 = vmatprep.subr.mxu0 0.0
    %511 = vmatpush1.msra.mxu0 0.0
    %512 = vmatprep.subr.mxu0 0.0
    %513 = vmatpush1.msra.mxu0 0.0
    %514 = vmatprep.subr.mxu0 0.0
    %515 = vmatpush1.msra.mxu0 0.0
    %516 = vmatprep.subr.mxu0 0.0
    %517 = vmatpush1.msra.mxu0 0.0
    %518 = vmatprep.subr.mxu0 0.0
    %519 = vmatpush1.msra.mxu0 0.0
    %520 = vmatprep.subr.mxu0 0.0
    %521 = vmatpush1.msra.mxu0 0.0
    %522 = vmatprep.subr.mxu0 0.0
    %523 = vmatpush1.msra.mxu0 0.0
    %524 = vmatprep.mubr.f32.mxu0 0.0
    %525 = vmatmul.mubr.f32.gmra.mrb[0].mxu0 %v451
    %v526 = vpop.f32.mrb[0].mxu0
    %v527 = vadd.f32 0.0, %v526
    %v528 = vpop.f32.mrb[0].mxu0
    %v529 = vadd.f32 0.0, %v528
    %530 = vdwg.mxu0
    %531 = vmatprep.subr.mxu0 0.0
    %532 = vmatpush1.msra.mxu0 %v458
    %533 = vmatprep.subr.mxu0 0.0
    %534 = vmatpush1.msra.mxu0 0.0
    %535 = vmatprep.subr.mxu0 0.0
    %536 = vmatpush1.msra.mxu0 0.0
    %537 = vmatprep.subr.mxu0 0.0
    %538 = vmatpush1.msra.mxu0 0.0
    %539 = vmatprep.subr.mxu0 0.0
    %540 = vmatpush1.msra.mxu0 0.0
    %541 = vmatprep.subr.mxu0 0.0
    %542 = vmatpush1.msra.mxu0 0.0
    %543 = vmatprep.subr.mxu0 0.0
    %544 = vmatpush1.msra.mxu0 0.0
    %545 = vmatprep.subr.mxu0 0.0
    %546 = vmatpush1.msra.mxu0 0.0
    %547 = vmatprep.subr.mxu0 0.0
    %548 = vmatpush1.msra.mxu0 0.0
    %549 = vmatprep.subr.mxu0 0.0
    %550 = vmatpush1.msra.mxu0 0.0
    %551 = vmatprep.subr.mxu0 0.0
    %552 = vmatpush1.msra.mxu0 0.0
    %553 = vmatprep.subr.mxu0 0.0
    %554 = vmatpush1.msra.mxu0 0.0
    %555 = vmatprep.subr.mxu0 0.0
    %556 = vmatpush1.msra.mxu0 0.0
    %557 = vmatprep.subr.mxu0 0.0
    %558 = vmatpush1.msra.mxu0 0.0
    %559 = vmatprep.subr.mxu0 0.0
    %560 = vmatpush1.msra.mxu0 0.0
    %561 = vmatprep.subr.mxu0 0.0
    %562 = vmatpush1.msra.mxu0 0.0
    %563 = vmatprep.subr.mxu0 0.0
    %564 = vmatpush1.msra.mxu0 0.0
    %565 = vmatprep.subr.mxu0 0.0
    %566 = vmatpush1.msra.mxu0 0.0
    %567 = vmatprep.subr.mxu0 0.0
    %568 = vmatpush1.msra.mxu0 0.0
    %569 = vmatprep.subr.mxu0 0.0
    %570 = vmatpush1.msra.mxu0 0.0
    %571 = vmatprep.subr.mxu0 0.0
    %572 = vmatpush1.msra.mxu0 0.0
    %573 = vmatprep.subr.mxu0 0.0
    %574 = vmatpush1.msra.mxu0 0.0
    %575 = vmatprep.subr.mxu0 0.0
    %576 = vmatpush1.msra.mxu0 0.0
    %577 = vmatprep.subr.mxu0 0.0
    %578 = vmatpush1.msra.mxu0 0.0
    %579 = vmatprep.subr.mxu0 0.0
    %580 = vmatpush1.msra.mxu0 0.0
    %581 = vmatprep.subr.mxu0 0.0
    %582 = vmatpush1.msra.mxu0 0.0
    %583 = vmatprep.subr.mxu0 0.0
    %584 = vmatpush1.msra.mxu0 0.0
    %585 = vmatprep.subr.mxu0 0.0
    %586 = vmatpush1.msra.mxu0 0.0
    %587 = vmatprep.subr.mxu0 0.0
    %588 = vmatpush1.msra.mxu0 0.0
    %589 = vmatprep.subr.mxu0 0.0
    %590 = vmatpush1.msra.mxu0 0.0
    %591 = vmatprep.subr.mxu0 0.0
    %592 = vmatpush1.msra.mxu0 0.0
    %593 = vmatprep.subr.mxu0 0.0
    %594 = vmatpush1.msra.mxu0 0.0
    %595 = vmatprep.mubr.f32.mxu0 0.0
    %596 = vmatmul.mubr.f32.gmra.mrb[0].mxu0 %v451
    %v597 = vpop.f32.mrb[0].mxu0
    %v598 = vadd.f32 0.0, %v597
    %v599 = vpop.f32.mrb[0].mxu0
    %600 = vdwg.mxu0
    %601 = vmatprep.subr.mxu0 %v253
    %602 = vmatpush1.msra.mxu0 %v252
    %603 = vmatprep.subr.mxu0 %v256
    %604 = vmatpush1.msra.mxu0 %v255
    %605 = vmatprep.subr.mxu0 %v259
    %606 = vmatpush1.msra.mxu0 %v258
    %607 = vmatprep.subr.mxu0 %v262
    %608 = vmatpush1.msra.mxu0 %v261
    %609 = vmatprep.subr.mxu0 %v265
    %610 = vmatpush1.msra.mxu0 %v264
    %611 = vmatprep.subr.mxu0 %v268
    %612 = vmatpush1.msra.mxu0 %v267
    %613 = vmatprep.subr.mxu0 %v271
    %614 = vmatpush1.msra.mxu0 %v270
    %615 = vmatprep.subr.mxu0 %v274
    %616 = vmatpush1.msra.mxu0 %v273
    %617 = vmatprep.subr.mxu0 %v277
    %618 = vmatpush1.msra.mxu0 %v276
    %619 = vmatprep.subr.mxu0 %v280
    %620 = vmatpush1.msra.mxu0 %v279
    %621 = vmatprep.subr.mxu0 %v283
    %622 = vmatpush1.msra.mxu0 %v282
    %623 = vmatprep.subr.mxu0 %v286
    %624 = vmatpush1.msra.mxu0 %v285
    %625 = vmatprep.subr.mxu0 %v289
    %626 = vmatpush1.msra.mxu0 %v288
    %627 = vmatprep.subr.mxu0 %v292
    %628 = vmatpush1.msra.mxu0 %v291
    %629 = vmatprep.subr.mxu0 %v295
    %630 = vmatpush1.msra.mxu0 %v294
    %631 = vmatprep.subr.mxu0 %v298
    %632 = vmatpush1.msra.mxu0 %v297
    %633 = vmatprep.subr.mxu0 %v301
    %634 = vmatpush1.msra.mxu0 %v300
    %635 = vmatprep.subr.mxu0 %v304
    %636 = vmatpush1.msra.mxu0 %v303
    %637 = vmatprep.subr.mxu0 %v307
    %638 = vmatpush1.msra.mxu0 %v306
    %639 = vmatprep.subr.mxu0 %v310
    %640 = vmatpush1.msra.mxu0 %v309
    %641 = vmatprep.subr.mxu0 %v313
    %642 = vmatpush1.msra.mxu0 %v312
    %643 = vmatprep.subr.mxu0 %v316
    %644 = vmatpush1.msra.mxu0 %v315
    %645 = vmatprep.subr.mxu0 %v319
    %646 = vmatpush1.msra.mxu0 %v318
    %647 = vmatprep.subr.mxu0 %v322
    %648 = vmatpush1.msra.mxu0 %v321
    %649 = vmatprep.subr.mxu0 %v325
    %650 = vmatpush1.msra.mxu0 %v324
    %651 = vmatprep.subr.mxu0 %v328
    %652 = vmatpush1.msra.mxu0 %v327
    %653 = vmatprep.subr.mxu0 %v331
    %654 = vmatpush1.msra.mxu0 %v330
    %655 = vmatprep.subr.mxu0 %v334
    %656 = vmatpush1.msra.mxu0 %v333
    %657 = vmatprep.subr.mxu0 %v337
    %658 = vmatpush1.msra.mxu0 %v336
    %659 = vmatprep.subr.mxu0 %v340
    %660 = vmatpush1.msra.mxu0 %v339
    %661 = vmatprep.subr.mxu0 %v343
    %662 = vmatpush1.msra.mxu0 %v342
    %663 = vmatprep.subr.mxu0 %v346
    %664 = vmatpush1.msra.mxu0 %v345
    %665 = vmatprep.mubr.f32.mxu0 %v249
    %666 = vmatmul.mubr.f32.gmra.mrb[0].mxu0 %v248
    %v667 = vpop.f32.mrb[0].mxu0
    %v668 = vadd.f32 %v527, %v667
    %v669 = vpop.f32.mrb[0].mxu0
    %v670 = vadd.f32 %v529, %v669
    %671 = vdwg.mxu0
    %672 = vmatprep.subr.mxu0 %v349
    %673 = vmatpush1.msra.mxu0 %v348
    %674 = vmatprep.subr.mxu0 %v352
    %675 = vmatpush1.msra.mxu0 %v351
    %676 = vmatprep.subr.mxu0 %v355
    %677 = vmatpush1.msra.mxu0 %v354
    %678 = vmatprep.subr.mxu0 %v358
    %679 = vmatpush1.msra.mxu0 %v357
    %680 = vmatprep.subr.mxu0 %v361
    %681 = vmatpush1.msra.mxu0 %v360
    %682 = vmatprep.subr.mxu0 %v364
    %683 = vmatpush1.msra.mxu0 %v363
    %684 = vmatprep.subr.mxu0 %v367
    %685 = vmatpush1.msra.mxu0 %v366
    %686 = vmatprep.subr.mxu0 %v370
    %687 = vmatpush1.msra.mxu0 %v369
    %688 = vmatprep.subr.mxu0 %v373
    %689 = vmatpush1.msra.mxu0 %v372
    %690 = vmatprep.subr.mxu0 %v376
    %691 = vmatpush1.msra.mxu0 %v375
    %692 = vmatprep.subr.mxu0 %v379
    %693 = vmatpush1.msra.mxu0 %v378
    %694 = vmatprep.subr.mxu0 %v382
    %695 = vmatpush1.msra.mxu0 %v381
    %696 = vmatprep.subr.mxu0 %v385
    %697 = vmatpush1.msra.mxu0 %v384
    %698 = vmatprep.subr.mxu0 %v388
    %699 = vmatpush1.msra.mxu0 %v387
    %700 = vmatprep.subr.mxu0 %v391
    %701 = vmatpush1.msra.mxu0 %v390
    %702 = vmatprep.subr.mxu0 %v394
    %703 = vmatpush1.msra.mxu0 %v393
    %704 = vmatprep.subr.mxu0 %v397
    %705 = vmatpush1.msra.mxu0 %v396
    %706 = vmatprep.subr.mxu0 %v400
    %707 = vmatpush1.msra.mxu0 %v399
    %708 = vmatprep.subr.mxu0 %v403
    %709 = vmatpush1.msra.mxu0 %v402
    %710 = vmatprep.subr.mxu0 %v406
    %711 = vmatpush1.msra.mxu0 %v405
    %712 = vmatprep.subr.mxu0 %v409
    %713 = vmatpush1.msra.mxu0 %v408
    %714 = vmatprep.subr.mxu0 %v412
    %715 = vmatpush1.msra.mxu0 %v411
    %716 = vmatprep.subr.mxu0 %v415
    %717 = vmatpush1.msra.mxu0 %v414
    %718 = vmatprep.subr.mxu0 %v418
    %719 = vmatpush1.msra.mxu0 %v417
    %720 = vmatprep.subr.mxu0 %v421
    %721 = vmatpush1.msra.mxu0 %v420
    %722 = vmatprep.subr.mxu0 %v424
    %723 = vmatpush1.msra.mxu0 %v423
    %724 = vmatprep.subr.mxu0 %v427
    %725 = vmatpush1.msra.mxu0 %v426
    %726 = vmatprep.subr.mxu0 %v430
    %727 = vmatpush1.msra.mxu0 %v429
    %728 = vmatprep.subr.mxu0 %v433
    %729 = vmatpush1.msra.mxu0 %v432
    %730 = vmatprep.subr.mxu0 %v436
    %731 = vmatpush1.msra.mxu0 %v435
    %732 = vmatprep.subr.mxu0 %v439
    %733 = vmatpush1.msra.mxu0 %v438
    %734 = vmatprep.subr.mxu0 %v442
    %735 = vmatpush1.msra.mxu0 %v441
    %736 = vmatprep.mubr.f32.mxu0 %v251
    %737 = vmatmul.mubr.f32.gmra.mrb[0].mxu0 %v250
    %v738 = vpop.f32.mrb[0].mxu0
    %v739 = vadd.f32 %v668, %v738
    %v740 = vpop.f32.mrb[0].mxu0
    %v741 = vadd.f32 %v670, %v740
    %742 = vdwg.mxu0
    %743 = vmatprep.subr.mxu0 0.0
    %744 = vmatpush1.msra.mxu0 %v254
    %745 = vmatprep.subr.mxu0 0.0
    %746 = vmatpush1.msra.mxu0 %v257
    %747 = vmatprep.subr.mxu0 0.0
    %748 = vmatpush1.msra.mxu0 %v260
    %749 = vmatprep.subr.mxu0 0.0
    %750 = vmatpush1.msra.mxu0 %v263
    %751 = vmatprep.subr.mxu0 0.0
    %752 = vmatpush1.msra.mxu0 %v266
    %753 = vmatprep.subr.mxu0 0.0
    %754 = vmatpush1.msra.mxu0 %v269
    %755 = vmatprep.subr.mxu0 0.0
    %756 = vmatpush1.msra.mxu0 %v272
    %757 = vmatprep.subr.mxu0 0.0
    %758 = vmatpush1.msra.mxu0 %v275
    %759 = vmatprep.subr.mxu0 0.0
    %760 = vmatpush1.msra.mxu0 %v278
    %761 = vmatprep.subr.mxu0 0.0
    %762 = vmatpush1.msra.mxu0 %v281
    %763 = vmatprep.subr.mxu0 0.0
    %764 = vmatpush1.msra.mxu0 %v284
    %765 = vmatprep.subr.mxu0 0.0
    %766 = vmatpush1.msra.mxu0 %v287
    %767 = vmatprep.subr.mxu0 0.0
    %768 = vmatpush1.msra.mxu0 %v290
    %769 = vmatprep.subr.mxu0 0.0
    %770 = vmatpush1.msra.mxu0 %v293
    %771 = vmatprep.subr.mxu0 0.0
    %772 = vmatpush1.msra.mxu0 %v296
    %773 = vmatprep.subr.mxu0 0.0
    %774 = vmatpush1.msra.mxu0 %v299
    %775 = vmatprep.subr.mxu0 0.0
    %776 = vmatpush1.msra.mxu0 %v302
    %777 = vmatprep.subr.mxu0 0.0
    %778 = vmatpush1.msra.mxu0 %v305
    %779 = vmatprep.subr.mxu0 0.0
    %780 = vmatpush1.msra.mxu0 %v308
    %781 = vmatprep.subr.mxu0 0.0
    %782 = vmatpush1.msra.mxu0 %v311
    %783 = vmatprep.subr.mxu0 0.0
    %784 = vmatpush1.msra.mxu0 %v314
    %785 = vmatprep.subr.mxu0 0.0
    %786 = vmatpush1.msra.mxu0 %v317
    %787 = vmatprep.subr.mxu0 0.0
    %788 = vmatpush1.msra.mxu0 %v320
    %789 = vmatprep.subr.mxu0 0.0
    %790 = vmatpush1.msra.mxu0 %v323
    %791 = vmatprep.subr.mxu0 0.0
    %792 = vmatpush1.msra.mxu0 %v326
    %793 = vmatprep.subr.mxu0 0.0
    %794 = vmatpush1.msra.mxu0 %v329
    %795 = vmatprep.subr.mxu0 0.0
    %796 = vmatpush1.msra.mxu0 %v332
    %797 = vmatprep.subr.mxu0 0.0
    %798 = vmatpush1.msra.mxu0 %v335
    %799 = vmatprep.subr.mxu0 0.0
    %800 = vmatpush1.msra.mxu0 %v338
    %801 = vmatprep.subr.mxu0 0.0
    %802 = vmatpush1.msra.mxu0 %v341
    %803 = vmatprep.subr.mxu0 0.0
    %804 = vmatpush1.msra.mxu0 %v344
    %805 = vmatprep.subr.mxu0 0.0
    %806 = vmatpush1.msra.mxu0 %v347
    %807 = vmatprep.mubr.f32.mxu0 %v249
    %808 = vmatmul.mubr.f32.gmra.mrb[0].mxu0 %v248
    %v809 = vpop.f32.mrb[0].mxu0
    %v810 = vadd.f32 %v598, %v809
    %v811 = vpop.f32.mrb[0].mxu0
    %812 = vdwg.mxu0
    %813 = vmatprep.subr.mxu0 0.0
    %814 = vmatpush1.msra.mxu0 %v350
    %815 = vmatprep.subr.mxu0 0.0
    %816 = vmatpush1.msra.mxu0 %v353
    %817 = vmatprep.subr.mxu0 0.0
    %818 = vmatpush1.msra.mxu0 %v356
    %819 = vmatprep.subr.mxu0 0.0
    %820 = vmatpush1.msra.mxu0 %v359
    %821 = vmatprep.subr.mxu0 0.0
    %822 = vmatpush1.msra.mxu0 %v362
    %823 = vmatprep.subr.mxu0 0.0
    %824 = vmatpush1.msra.mxu0 %v365
    %825 = vmatprep.subr.mxu0 0.0
    %826 = vmatpush1.msra.mxu0 %v368
    %827 = vmatprep.subr.mxu0 0.0
    %828 = vmatpush1.msra.mxu0 %v371
    %829 = vmatprep.subr.mxu0 0.0
    %830 = vmatpush1.msra.mxu0 %v374
    %831 = vmatprep.subr.mxu0 0.0
    %832 = vmatpush1.msra.mxu0 %v377
    %833 = vmatprep.subr.mxu0 0.0
    %834 = vmatpush1.msra.mxu0 %v380
    %835 = vmatprep.subr.mxu0 0.0
    %836 = vmatpush1.msra.mxu0 %v383
    %837 = vmatprep.subr.mxu0 0.0
    %838 = vmatpush1.msra.mxu0 %v386
    %839 = vmatprep.subr.mxu0 0.0
    %840 = vmatpush1.msra.mxu0 %v389
    %841 = vmatprep.subr.mxu0 0.0
    %842 = vmatpush1.msra.mxu0 %v392
    %843 = vmatprep.subr.mxu0 0.0
    %844 = vmatpush1.msra.mxu0 %v395
    %845 = vmatprep.subr.mxu0 0.0
    %846 = vmatpush1.msra.mxu0 %v398
    %847 = vmatprep.subr.mxu0 0.0
    %848 = vmatpush1.msra.mxu0 %v401
    %849 = vmatprep.subr.mxu0 0.0
    %850 = vmatpush1.msra.mxu0 %v404
    %851 = vmatprep.subr.mxu0 0.0
    %852 = vmatpush1.msra.mxu0 %v407
    %853 = vmatprep.subr.mxu0 0.0
    %854 = vmatpush1.msra.mxu0 %v410
    %855 = vmatprep.subr.mxu0 0.0
    %856 = vmatpush1.msra.mxu0 %v413
    %857 = vmatprep.subr.mxu0 0.0
    %858 = vmatpush1.msra.mxu0 %v416
    %859 = vmatprep.subr.mxu0 0.0
    %860 = vmatpush1.msra.mxu0 %v419
    %861 = vmatprep.subr.mxu0 0.0
    %862 = vmatpush1.msra.mxu0 %v422
    %863 = vmatprep.subr.mxu0 0.0
    %864 = vmatpush1.msra.mxu0 %v425
    %865 = vmatprep.subr.mxu0 0.0
    %866 = vmatpush1.msra.mxu0 %v428
    %867 = vmatprep.subr.mxu0 0.0
    %868 = vmatpush1.msra.mxu0 %v431
    %869 = vmatprep.subr.mxu0 0.0
    %870 = vmatpush1.msra.mxu0 %v434
    %871 = vmatprep.subr.mxu0 0.0
    %872 = vmatpush1.msra.mxu0 %v437
    %873 = vmatprep.subr.mxu0 0.0
    %874 = vmatpush1.msra.mxu0 %v440
    %875 = vmatprep.subr.mxu0 0.0
    %876 = vmatpush1.msra.mxu0 %v443
    %877 = vmatprep.mubr.f32.mxu0 %v251
    %878 = vmatmul.mubr.f32.gmra.mrb[0].mxu0 %v250
    %v879 = vpop.f32.mrb[0].mxu0
    %v880 = vadd.f32 %v810, %v879
    %v881 = vpop.f32.mrb[0].mxu0
    %882 = vdwg.mxu0
    %v883 = vld [vmem:[%s6] sm:$0x7]
    %v885 = vlaneseq
    %v886 = vshrl.u32 %v885, 7
    %v887 = vsub.s32 0, %v886
    %v888 = vrot.slane %v883, %v887
    %v889 = vlaneseq
    %v890 = vshrl.u32 %v889, 7
    %v891 = vsub.s32 1, %v890
    %v892 = vrot.slane %v883, %v891
    %v893 = vlaneseq
    %v894 = vshrl.u32 %v893, 7
    %v895 = vsub.s32 2, %v894
    %v896 = vrot.slane %v883, %v895
    %v900 = vadd.f32 %v739, %v888
    %v901 = vadd.f32 %v741, %v892
    %v902 = vadd.f32 %v880, %v896
    %v903 = vmax.f32 %v900, 0.0
    %v904 = vmax.f32 %v901, 0.0
    %v905 = vmax.f32 %v902, 0.0
    %v906 = vld [vmem:[%s7] sm:$0x7]
    %s907 = sld [smem:[#allocation2]]
    %v908 = vstv %s907
    %v910 = vlaneseq
    %v911 = vshrl.u32 %v910, 7
    %v912 = vsub.s32 0, %v911
    %v913 = vrot.slane %v906, %v912
    %v914 = vlaneseq
    %v915 = vshrl.u32 %v914, 7
    %v916 = vsub.s32 1, %v915
    %v917 = vrot.slane %v906, %v916
    %v918 = vlaneseq
    %v919 = vshrl.u32 %v918, 7
    %v920 = vsub.s32 2, %v919
    %v921 = vrot.slane %v906, %v920
    %925 = vmatprep.subr.mxu0 %v904
    %926 = vmatpush1.xpose.msra.mxu0 %v903
    %927 = vmatprep.subr.mxu0 0.0
    %928 = vmatpush1.xpose.msra.mxu0 0.0
    %929 = vmatprep.subr.mxu0 0.0
    %930 = vmatpush1.xpose.msra.mxu0 0.0
    %931 = vmatprep.subr.mxu0 0.0
    %932 = vmatpush1.xpose.msra.mxu0 0.0
    %933 = vmatprep.subr.mxu0 0.0
    %934 = vmatpush1.xpose.msra.mxu0 0.0
    %935 = vmatprep.subr.mxu0 0.0
    %936 = vmatpush1.xpose.msra.mxu0 0.0
    %937 = vmatprep.subr.mxu0 0.0
    %938 = vmatpush1.xpose.msra.mxu0 0.0
    %939 = vmatprep.subr.mxu0 0.0
    %940 = vmatpush1.xpose.msra.mxu0 0.0
    %941 = vmatprep.subr.mxu0 0.0
    %942 = vmatpush1.xpose.msra.mxu0 0.0
    %943 = vmatprep.subr.mxu0 0.0
    %944 = vmatpush1.xpose.msra.mxu0 0.0
    %945 = vmatprep.subr.mxu0 0.0
    %946 = vmatpush1.xpose.msra.mxu0 0.0
    %947 = vmatprep.subr.mxu0 0.0
    %948 = vmatpush1.xpose.msra.mxu0 0.0
    %949 = vmatprep.subr.mxu0 0.0
    %950 = vmatpush1.xpose.msra.mxu0 0.0
    %951 = vmatprep.subr.mxu0 0.0
    %952 = vmatpush1.xpose.msra.mxu0 0.0
    %953 = vmatprep.subr.mxu0 0.0
    %954 = vmatpush1.xpose.msra.mxu0 0.0
    %955 = vmatprep.subr.mxu0 0.0
    %956 = vmatpush1.xpose.msra.mxu0 0.0
    %957 = vmatprep.subr.mxu0 0.0
    %958 = vmatpush1.xpose.msra.mxu0 0.0
    %959 = vmatprep.subr.mxu0 0.0
    %960 = vmatpush1.xpose.msra.mxu0 0.0
    %961 = vmatprep.subr.mxu0 0.0
    %962 = vmatpush1.xpose.msra.mxu0 0.0
    %963 = vmatprep.subr.mxu0 0.0
    %964 = vmatpush1.xpose.msra.mxu0 0.0
    %965 = vmatprep.subr.mxu0 0.0
    %966 = vmatpush1.xpose.msra.mxu0 0.0
    %967 = vmatprep.subr.mxu0 0.0
    %968 = vmatpush1.xpose.msra.mxu0 0.0
    %969 = vmatprep.subr.mxu0 0.0
    %970 = vmatpush1.xpose.msra.mxu0 0.0
    %971 = vmatprep.subr.mxu0 0.0
    %972 = vmatpush1.xpose.msra.mxu0 0.0
    %973 = vmatprep.subr.mxu0 0.0
    %974 = vmatpush1.xpose.msra.mxu0 0.0
    %975 = vmatprep.subr.mxu0 0.0
    %976 = vmatpush1.xpose.msra.mxu0 0.0
    %977 = vmatprep.subr.mxu0 0.0
    %978 = vmatpush1.xpose.msra.mxu0 0.0
    %979 = vmatprep.subr.mxu0 0.0
    %980 = vmatpush1.xpose.msra.mxu0 0.0
    %981 = vmatprep.subr.mxu0 0.0
    %982 = vmatpush1.xpose.msra.mxu0 0.0
    %983 = vmatprep.subr.mxu0 0.0
    %984 = vmatpush1.xpose.msra.mxu0 0.0
    %985 = vmatprep.subr.mxu0 0.0
    %986 = vmatpush1.xpose.msra.mxu0 0.0
    %987 = vmatprep.subr.mxu0 0.0
    %988 = vmatpush1.xpose.msra.mxu0 0.0
    %989 = vmatprep.mubr.f32.mxu0 %v917
    %990 = vmatmul.mubr.f32.gmra.mrb[0].mxu0 %v913
    %v991 = vpop.f32.mrb[0].mxu0
    %v992 = vadd.f32 %v908, %v991
    %v993 = vpop.f32.mrb[0].mxu0
    %994 = vdwg.mxu0
    %995 = vmatprep.subr.mxu0 0.0
    %996 = vmatpush1.xpose.msra.mxu0 %v905
    %997 = vmatprep.subr.mxu0 0.0
    %998 = vmatpush1.xpose.msra.mxu0 0.0
    %999 = vmatprep.subr.mxu0 0.0
    %1000 = vmatpush1.xpose.msra.mxu0 0.0
    %1001 = vmatprep.subr.mxu0 0.0
    %1002 = vmatpush1.xpose.msra.mxu0 0.0
    %1003 = vmatprep.subr.mxu0 0.0
    %1004 = vmatpush1.xpose.msra.mxu0 0.0
    %1005 = vmatprep.subr.mxu0 0.0
    %1006 = vmatpush1.xpose.msra.mxu0 0.0
    %1007 = vmatprep.subr.mxu0 0.0
    %1008 = vmatpush1.xpose.msra.mxu0 0.0
    %1009 = vmatprep.subr.mxu0 0.0
    %1010 = vmatpush1.xpose.msra.mxu0 0.0
    %1011 = vmatprep.subr.mxu0 0.0
    %1012 = vmatpush1.xpose.msra.mxu0 0.0
    %1013 = vmatprep.subr.mxu0 0.0
    %1014 = vmatpush1.xpose.msra.mxu0 0.0
    %1015 = vmatprep.subr.mxu0 0.0
    %1016 = vmatpush1.xpose.msra.mxu0 0.0
    %1017 = vmatprep.subr.mxu0 0.0
    %1018 = vmatpush1.xpose.msra.mxu0 0.0
    %1019 = vmatprep.subr.mxu0 0.0
    %1020 = vmatpush1.xpose.msra.mxu0 0.0
    %1021 = vmatprep.subr.mxu0 0.0
    %1022 = vmatpush1.xpose.msra.mxu0 0.0
    %1023 = vmatprep.subr.mxu0 0.0
    %1024 = vmatpush1.xpose.msra.mxu0 0.0
    %1025 = vmatprep.subr.mxu0 0.0
    %1026 = vmatpush1.xpose.msra.mxu0 0.0
    %1027 = vmatprep.subr.mxu0 0.0
    %1028 = vmatpush1.xpose.msra.mxu0 0.0
    %1029 = vmatprep.subr.mxu0 0.0
    %1030 = vmatpush1.xpose.msra.mxu0 0.0
    %1031 = vmatprep.subr.mxu0 0.0
    %1032 = vmatpush1.xpose.msra.mxu0 0.0
    %1033 = vmatprep.subr.mxu0 0.0
    %1034 = vmatpush1.xpose.msra.mxu0 0.0
    %1035 = vmatprep.subr.mxu0 0.0
    %1036 = vmatpush1.xpose.msra.mxu0 0.0
    %1037 = vmatprep.subr.mxu0 0.0
    %1038 = vmatpush1.xpose.msra.mxu0 0.0
    %1039 = vmatprep.subr.mxu0 0.0
    %1040 = vmatpush1.xpose.msra.mxu0 0.0
    %1041 = vmatprep.subr.mxu0 0.0
    %1042 = vmatpush1.xpose.msra.mxu0 0.0
    %1043 = vmatprep.subr.mxu0 0.0
    %1044 = vmatpush1.xpose.msra.mxu0 0.0
    %1045 = vmatprep.subr.mxu0 0.0
    %1046 = vmatpush1.xpose.msra.mxu0 0.0
    %1047 = vmatprep.subr.mxu0 0.0
    %1048 = vmatpush1.xpose.msra.mxu0 0.0
    %1049 = vmatprep.subr.mxu0 0.0
    %1050 = vmatpush1.xpose.msra.mxu0 0.0
    %1051 = vmatprep.subr.mxu0 0.0
    %1052 = vmatpush1.xpose.msra.mxu0 0.0
    %1053 = vmatprep.subr.mxu0 0.0
    %1054 = vmatpush1.xpose.msra.mxu0 0.0
    %1055 = vmatprep.subr.mxu0 0.0
    %1056 = vmatpush1.xpose.msra.mxu0 0.0
    %1057 = vmatprep.subr.mxu0 0.0
    %1058 = vmatpush1.xpose.msra.mxu0 0.0
    %1059 = vmatprep.mubr.f32.mxu0 0.0
    %1060 = vmatmul.mubr.f32.gmra.mrb[0].mxu0 %v921
    %v1061 = vpop.f32.mrb[0].mxu0
    %v1062 = vadd.f32 %v992, %v1061
    %v1063 = vpop.f32.mrb[0].mxu0
    %1064 = vdwg.mxu0
    %vm1065 = vcmask 57344
    %1066 = vst.msk [vmem:[#allocation8] sm:$0x1] %vm1065, %v1062
    // Predicated region
    $region46: #{tpu_custom_call.1} parent=1 // pred_check
      _
    $region47: #{tpu_custom_call.1} parent=1 // pred_check_branch
      %1068 = sbr.rel (0) target = $region49
    $region48: #{tpu_custom_call.1} parent=1 // pred_region
      %s1070 = ssub.s32 16, 16
      %1071 = vsyncadd [#allocation5], %s1070
      %s1073 = sshll.u32 [#allocation8], 4
      %s1074 = int_to_ptr.vmem [resolvable:$true] %s1073
      %1076 = dma.vmem_to_hbm [thread:$0]  %s1074, 16, %s9, [#allocation5]
    $region49: #{tpu_custom_call.1} parent=1 // pred_fallthru
      _
    // Predicated region
    $region50: #{tpu_custom_call.1} parent=1 // pred_check
      _
    $region51: #{tpu_custom_call.1} parent=1 // pred_check_branch
      %1078 = sbr.rel (0) target = $region53
    $region52: #{tpu_custom_call.1} parent=1 // pred_region
      %1079 = dma.done [#allocation5], 16
    $region53: #{tpu_custom_call.1} parent=1 // pred_fallthru
      _
    %1080 = vsyncpa [#allocation4], 1
    %1081 = vsyncpa [#allocation7], 1
    %1082 = vsyncpa [#allocation5], 1

</llo_original>
